<compile_context>
chip_gen: v6e
topology: v6e:2x2x1
jax: 0.10.0
libtpu: 0.0.40
codegen_flags: <defaults>
</compile_context>

<pallas_src>
import jax
import jax.numpy as jnp
import numpy as np
from jax.experimental import pallas as pl
from jax.experimental.pallas import tpu as pltpu

# ---- module-consistent configuration ----
N_NODES = 64        # number of nodes in x
F_IN    = 32        # input_dim1 (hop == 1  =>  node feature dim == input_dim1)
HIDDEN  = 64        # hidden_dim
OUT_DIM = 1         # output_dim (affinity score)
N_EDGES = 1024      # edges scored per call (batched per perf review)
E_BLOCK = 256       # edges per grid step (lane axis, multiple of 128)
HOP     = 1


# ----------------------------- Pallas kernel -----------------------------
def predict_kernel(edge_ref, xt_ref, w1a_ref, w1b_ref, b1_ref, w2_ref, b2_ref, out_ref):
    """One grid step scores E_BLOCK edges; edges live on the lane axis throughout.

    edge_ref: (2, E_BLOCK) int32   xt_ref: (F, N) f32
    w1a_ref/w1b_ref: (H, F) f32    b1_ref: (H, 1) f32
    w2_ref: (H, 1) f32             b2_ref: (1, 1) f32
    out_ref: (1, E_BLOCK) f32
    """
    N = xt_ref.shape[1]

    # --- preamble (edge independent): fold fc1's concat into a node-indexed table ---
    #     RHS = [ W1a @ x.T | W1b @ x.T ]  -> (H, 2N) = (64, 128), one full f32 lane tile.
    xt_bf = xt_ref[...].astype(jnp.bfloat16)
    rhs_src = jnp.dot(w1a_ref[...].astype(jnp.bfloat16), xt_bf,
                      preferred_element_type=jnp.float32)            # (H, N)
    rhs_dst = jnp.dot(w1b_ref[...].astype(jnp.bfloat16), xt_bf,
                      preferred_element_type=jnp.float32)            # (H, N)
    rhs = jnp.concatenate([rhs_src, rhs_dst], axis=1).astype(jnp.bfloat16)   # (H, 2N)

    # --- gather + fc1 as ONE lane-full K=2N matmul over a bf16 one-hot selector ---
    ei = edge_ref[...]                                   # (2, E_BLOCK) int32
    src = ei[0:1, :]                                     # (1, E_BLOCK)
    dst = ei[1:2, :] + N                                 # (1, E_BLOCK), shifted into [N, 2N)
    rows = jax.lax.broadcasted_iota(jnp.int32, (2 * N, ei.shape[1]), 0)
    onehot = jnp.where(jnp.logical_or(rows == src, rows == dst),
                       1.0, 0.0).astype(jnp.bfloat16)    # (2N, E_BLOCK), exact in bf16

    h = jnp.dot(rhs, onehot, preferred_element_type=jnp.float32) + b1_ref[...]  # (H, E_BLOCK)
    h = jnp.maximum(h, 0.0)                              # ReLU (f32 epilogue, v5e-safe)

    # --- fc2 (out_dim = 1): VPU multiply + cross-sublane reduce (no degenerate MXU matmul) ---
    z = jnp.sum(h * w2_ref[...], axis=0, keepdims=True) + b2_ref[...]           # (1, E_BLOCK)

    # --- sigmoid on the otherwise-idle EUP slot; lane-dense store ---
    out_ref[...] = pl.reciprocal(1.0 + jnp.exp(-z), approx=True)


# ----------------------------- wrapper -----------------------------
def predict_layer(edge_index, x, w1, b1, w2, b2):
    """edge_index: (2, E) int; x: (N, F) f32.
    Parameters in PyTorch nn.Linear layout: w1 (H, 2F), b1 (H,), w2 (O, H), b2 (O,)."""
    E = edge_index.shape[1]
    assert E % E_BLOCK == 0, "edge batch must be a multiple of E_BLOCK"
    F = x.shape[1]
    H = w1.shape[0]
    assert w2.shape[0] == 1, "VPU-reduce fc2 path assumes output_dim == 1"

    # Layout plumbing only (no module compute hoisted out of the kernel):
    xt  = x.T                          # (F, N)  features-on-sublanes / nodes-on-lanes
    w1a = w1[:, :F]                    # (H, F)  fc1 weight half acting on the src node
    w1b = w1[:, F:]                    # (H, F)  fc1 weight half acting on the dst node
    b1c = b1.reshape(H, 1)             # (H, 1)  broadcast along lanes in-kernel
    w2c = w2.T                         # (H, 1)
    b2c = b2.reshape(1, 1)             # (1, 1)

    resident = pl.BlockSpec(memory_space=pltpu.MemorySpace.VMEM)   # whole array, VMEM resident

    out_row = pl.pallas_call(
        predict_kernel,
        out_shape=jax.ShapeDtypeStruct((1, E), jnp.float32),        # edges on the lane axis
        grid=(E // E_BLOCK,),
        in_specs=[
            pl.BlockSpec((2, E_BLOCK), lambda i: (0, i)),           # lane-dense edge-id blocks
            resident, resident, resident, resident, resident, resident,
        ],
        out_specs=pl.BlockSpec((1, E_BLOCK), lambda i: (0, i)),     # lane-dense output blocks
        compiler_params=pltpu.CompilerParams(dimension_semantics=("parallel",)),
    )(edge_index.astype(jnp.int32), xt, w1a, w1b, b1c, w2c, b2c)

    return out_row.reshape(E, OUT_DIM)                              # PyTorch returns (E, output_dim)


# ----------------------------- pure-JAX reference (PyTorch semantics) -----------------------------
def reference(edge_index, x, w1, b1, w2, b2):
    node_feat = x[edge_index]                                       # (2, E, F)  == torch: x[edge_index]
    cat = jnp.concatenate([node_feat[0], node_feat[1]], axis=1)     # (E, 2F)
    h = jnp.maximum(cat @ w1.T + b1, 0.0)
    return jax.nn.sigmoid(h @ w2.T + b2)                            # (E, 1)


# ----------------------------- driver -----------------------------
if __name__ == "__main__":
    key = jax.random.PRNGKey(0)
    k_x, k_e, k_w1, k_b1, k_w2, k_b2 = jax.random.split(key, 6)

    x = jax.random.normal(k_x, (N_NODES, F_IN), dtype=jnp.float32)
    edge_index = jax.random.randint(k_e, (2, N_EDGES), 0, N_NODES, dtype=jnp.int32)

    # PyTorch nn.Linear layouts: weight (out_features, in_features), bias (out_features,)
    w1 = jax.random.normal(k_w1, (HIDDEN, 2 * F_IN), dtype=jnp.float32) * 0.1
    b1 = jax.random.normal(k_b1, (HIDDEN,), dtype=jnp.float32) * 0.1
    w2 = jax.random.normal(k_w2, (OUT_DIM, HIDDEN), dtype=jnp.float32) * 0.1
    b2 = jax.random.normal(k_b2, (OUT_DIM,), dtype=jnp.float32) * 0.1

    out = predict_layer(edge_index, x, w1, b1, w2, b2)
    jax.block_until_ready(out)

    ref = reference(edge_index, x, w1, b1, w2, b2)
    # bf16 MXU operands + approximate EUP reciprocal (per perf review) -> allow ~1e-2 on a
    # sigmoid output in [0, 1]; measured error is typically a few e-3.
    np.testing.assert_allclose(np.asarray(out), np.asarray(ref), atol=1e-2, rtol=1e-2)
    assert out.shape == (N_EDGES, OUT_DIM)
    print("KERNEL_OK")
</pallas_src>

<mosaic_0001>
module attributes {stable_mosaic.version = 11 : i64} {
  func.func @predict_kernel(%arg0: i32, %arg1: memref<2x256xi32, #tpu.memory_space<vmem>>, %arg2: memref<32x64xf32, #tpu.memory_space<vmem>>, %arg3: memref<64x32xf32, #tpu.memory_space<vmem>>, %arg4: memref<64x32xf32, #tpu.memory_space<vmem>>, %arg5: memref<64x1xf32, #tpu.memory_space<vmem>>, %arg6: memref<64x1xf32, #tpu.memory_space<vmem>>, %arg7: memref<1x1xf32, #tpu.memory_space<vmem>>, %arg8: memref<1x256xf32, #tpu.memory_space<vmem>>) attributes {dimension_semantics = [#tpu.dimension_semantics<parallel>], iteration_bounds = array<i64: 4>, scalar_prefetch = 0 : i64, scratch_operands = 0 : i64, tpu.core_type = #tpu.core_type<tc>, window_params = [{transform_indices = @transform_0, window_bounds = array<i64: 2, 256>}, {pipeline_mode = #tpu.pipeline_mode<synchronous>, transform_indices = @transform_1, window_bounds = array<i64: 32, 64>}, {pipeline_mode = #tpu.pipeline_mode<synchronous>, transform_indices = @transform_2, window_bounds = array<i64: 64, 32>}, {pipeline_mode = #tpu.pipeline_mode<synchronous>, transform_indices = @transform_3, window_bounds = array<i64: 64, 32>}, {pipeline_mode = #tpu.pipeline_mode<synchronous>, transform_indices = @transform_4, window_bounds = array<i64: 64, 1>}, {pipeline_mode = #tpu.pipeline_mode<synchronous>, transform_indices = @transform_5, window_bounds = array<i64: 64, 1>}, {pipeline_mode = #tpu.pipeline_mode<synchronous>, transform_indices = @transform_6, window_bounds = array<i64: 1, 1>}, {transform_indices = @transform_7, window_bounds = array<i64: 1, 256>}]} {
    %c0 = arith.constant 0 : index
    %c0_0 = arith.constant 0 : index
    %0 = vector.load %arg2[%c0, %c0_0] : memref<32x64xf32, #tpu.memory_space<vmem>>, vector<32x64xf32>
    %1 = arith.truncf %0 : vector<32x64xf32> to vector<32x64xbf16>
    %c0_1 = arith.constant 0 : index
    %c0_2 = arith.constant 0 : index
    %2 = vector.load %arg3[%c0_1, %c0_2] : memref<64x32xf32, #tpu.memory_space<vmem>>, vector<64x32xf32>
    %3 = arith.truncf %2 : vector<64x32xf32> to vector<64x32xbf16>
    %cst = arith.constant dense<0.000000e+00> : vector<64x64xf32>
    %4 = tpu.matmul %3, %1, %cst {dimension_numbers = #tpu.dot_dimension_numbers<[1], [0], [0], [1], [0, 0, 1, 1], [], []>} : vector<64x32xbf16>, vector<32x64xbf16>, vector<64x64xf32> -> vector<64x64xf32>
    %c0_3 = arith.constant 0 : index
    %c0_4 = arith.constant 0 : index
    %5 = vector.load %arg4[%c0_3, %c0_4] : memref<64x32xf32, #tpu.memory_space<vmem>>, vector<64x32xf32>
    %6 = arith.truncf %5 : vector<64x32xf32> to vector<64x32xbf16>
    %cst_5 = arith.constant dense<0.000000e+00> : vector<64x64xf32>
    %7 = tpu.matmul %6, %1, %cst_5 {dimension_numbers = #tpu.dot_dimension_numbers<[1], [0], [0], [1], [0, 0, 1, 1], [], []>} : vector<64x32xbf16>, vector<32x64xbf16>, vector<64x64xf32> -> vector<64x64xf32>
    %8 = tpu.concatenate %4, %7 in 1 : vector<64x64xf32>, vector<64x64xf32> -> vector<64x128xf32>
    %9 = arith.truncf %8 : vector<64x128xf32> to vector<64x128xbf16>
    %c0_6 = arith.constant 0 : index
    %c0_7 = arith.constant 0 : index
    %10 = vector.load %arg1[%c0_6, %c0_7] : memref<2x256xi32, #tpu.memory_space<vmem>>, vector<2x256xi32>
    %11 = vector.extract_strided_slice %10 {offsets = [0, 0], sizes = [1, 256], strides = [1, 1]} : vector<2x256xi32> to vector<1x256xi32>
    %12 = vector.extract_strided_slice %10 {offsets = [1, 0], sizes = [1, 256], strides = [1, 1]} : vector<2x256xi32> to vector<1x256xi32>
    %c64_i32 = arith.constant 64 : i32
    %13 = vector.broadcast %c64_i32 : i32 to vector<1x256xi32>
    %14 = arith.addi %12, %13 : vector<1x256xi32>
    %15 = tpu.iota {dimensions = array<i32: 0>} : vector<128x256xi32>
    %16 = vector.broadcast %11 : vector<1x256xi32> to vector<128x256xi32>
    %17 = arith.cmpi eq, %15, %16 : vector<128x256xi32>
    %18 = vector.broadcast %14 : vector<1x256xi32> to vector<128x256xi32>
    %19 = arith.cmpi eq, %15, %18 : vector<128x256xi32>
    %20 = arith.ori %17, %19 : vector<128x256xi1>
    %cst_8 = arith.constant 1.000000e+00 : f32
    %cst_9 = arith.constant 0.000000e+00 : f32
    %21 = vector.broadcast %cst_8 : f32 to vector<128x256xf32>
    %22 = vector.broadcast %cst_9 : f32 to vector<128x256xf32>
    %23 = arith.select %20, %21, %22 : vector<128x256xi1>, vector<128x256xf32>
    %24 = arith.truncf %23 : vector<128x256xf32> to vector<128x256xbf16>
    %cst_10 = arith.constant dense<0.000000e+00> : vector<64x256xf32>
    %25 = tpu.matmul %9, %24, %cst_10 {dimension_numbers = #tpu.dot_dimension_numbers<[1], [0], [0], [1], [0, 0, 1, 1], [], []>} : vector<64x128xbf16>, vector<128x256xbf16>, vector<64x256xf32> -> vector<64x256xf32>
    %c0_11 = arith.constant 0 : index
    %c0_12 = arith.constant 0 : index
    %26 = vector.load %arg5[%c0_11, %c0_12] : memref<64x1xf32, #tpu.memory_space<vmem>>, vector<64x1xf32>
    %27 = vector.broadcast %26 : vector<64x1xf32> to vector<64x256xf32>
    %28 = arith.addf %25, %27 : vector<64x256xf32>
    %cst_13 = arith.constant 0.000000e+00 : f32
    %29 = vector.broadcast %cst_13 : f32 to vector<64x256xf32>
    %30 = arith.maximumf %28, %29 : vector<64x256xf32>
    %c0_14 = arith.constant 0 : index
    %c0_15 = arith.constant 0 : index
    %31 = vector.load %arg6[%c0_14, %c0_15] : memref<64x1xf32, #tpu.memory_space<vmem>>, vector<64x1xf32>
    %32 = vector.broadcast %31 : vector<64x1xf32> to vector<64x256xf32>
    %33 = arith.mulf %30, %32 : vector<64x256xf32>
    %cst_16 = arith.constant dense<0.000000e+00> : vector<256xf32>
    %34 = vector.multi_reduction <add>, %33, %cst_16 [0] : vector<64x256xf32> to vector<256xf32>
    %35 = vector.shape_cast %34 : vector<256xf32> to vector<1x256xf32>
    %c0_17 = arith.constant 0 : index
    %c0_18 = arith.constant 0 : index
    %36 = vector.load %arg7[%c0_17, %c0_18] : memref<1x1xf32, #tpu.memory_space<vmem>>, vector<1x1xf32>
    %37 = vector.broadcast %36 : vector<1x1xf32> to vector<1x256xf32>
    %38 = arith.addf %35, %37 : vector<1x256xf32>
    %cst_19 = arith.constant 0.000000e+00 : f32
    %39 = vector.broadcast %cst_19 : f32 to vector<1x256xf32>
    %40 = arith.subf %39, %38 : vector<1x256xf32>
    %41 = math.exp %40 : vector<1x256xf32>
    %cst_20 = arith.constant 1.000000e+00 : f32
    %42 = vector.broadcast %cst_20 : f32 to vector<1x256xf32>
    %43 = arith.addf %42, %41 : vector<1x256xf32>
    %44 = tpu.reciprocal %43 {approx = true} : vector<1x256xf32> -> vector<1x256xf32>
    %c0_21 = arith.constant 0 : index
    %c0_22 = arith.constant 0 : index
    %45 = vector.load %arg8[%c0_21, %c0_22] : memref<1x256xf32, #tpu.memory_space<vmem>>, vector<1x256xf32>
    tpu.vector_store %arg8[%c0_21, %c0_22], %44 {strides = array<i32>} : memref<1x256xf32, #tpu.memory_space<vmem>>, vector<1x256xf32>,
    return
  }
  func.func @transform_0(%arg0: i32) -> (i32, i32) {
    %c0_i32 = arith.constant 0 : i32
    %c0_i32_0 = arith.constant 0 : i32
    return %c0_i32, %arg0 : i32, i32
  }
  func.func @transform_1(%arg0: i32) -> (i32, i32) {
    %c0_i32 = arith.constant 0 : i32
    %c0_i32_0 = arith.constant 0 : i32
    %c0_i32_1 = arith.constant 0 : i32
    return %c0_i32, %c0_i32_0 : i32, i32
  }
  func.func @transform_2(%arg0: i32) -> (i32, i32) {
    %c0_i32 = arith.constant 0 : i32
    %c0_i32_0 = arith.constant 0 : i32
    %c0_i32_1 = arith.constant 0 : i32
    return %c0_i32, %c0_i32_0 : i32, i32
  }
  func.func @transform_3(%arg0: i32) -> (i32, i32) {
    %c0_i32 = arith.constant 0 : i32
    %c0_i32_0 = arith.constant 0 : i32
    %c0_i32_1 = arith.constant 0 : i32
    return %c0_i32, %c0_i32_0 : i32, i32
  }
  func.func @transform_4(%arg0: i32) -> (i32, i32) {
    %c0_i32 = arith.constant 0 : i32
    %c0_i32_0 = arith.constant 0 : i32
    %c0_i32_1 = arith.constant 0 : i32
    return %c0_i32, %c0_i32_0 : i32, i32
  }
  func.func @transform_5(%arg0: i32) -> (i32, i32) {
    %c0_i32 = arith.constant 0 : i32
    %c0_i32_0 = arith.constant 0 : i32
    %c0_i32_1 = arith.constant 0 : i32
    return %c0_i32, %c0_i32_0 : i32, i32
  }
  func.func @transform_6(%arg0: i32) -> (i32, i32) {
    %c0_i32 = arith.constant 0 : i32
    %c0_i32_0 = arith.constant 0 : i32
    %c0_i32_1 = arith.constant 0 : i32
    return %c0_i32, %c0_i32_0 : i32, i32
  }
  func.func @transform_7(%arg0: i32) -> (i32, i32) {
    %c0_i32 = arith.constant 0 : i32
    %c0_i32_0 = arith.constant 0 : i32
    return %c0_i32, %arg0 : i32, i32
  }
}

</mosaic_0001>

<llo_original>
// kernel: tpu_custom_call.1
$region0: #{tpu_custom_call.1}
  #allocation0 [shape = 'u32[]', space=smem, size = 0x4, offset = 0x4, fixed_abs, tag = 'smem constant byte address 0x4 - core index']
  #allocation1 [shape = 'u32[144,128]{1,0:T(1,128)}', space=vmem, size = 0x12000, scoped, tag = 'internal scratch']
  #allocation2 [shape = 'f32[1,1]{1,0:T(1,128)S(1)}', space=vmem, size = 0x200, scoped, tag = 'scoped memory for tpu_custom_call.1']
  %s0 = inlined_call_operand.vmem [shape: s32[2,1024], index: 0, kind: input, shape index: {}]
  %s1 = inlined_call_operand.vmem [shape: f32[32,64], index: 1, kind: input, shape index: {}]
  %s2 = inlined_call_operand.vmem [shape: f32[64,32], index: 2, kind: input, shape index: {}]
  %s3 = inlined_call_operand.vmem [shape: f32[64,32], index: 3, kind: input, shape index: {}]
  %s4 = inlined_call_operand.vmem [shape: f32[64,1], index: 4, kind: input, shape index: {}]
  %s5 = inlined_call_operand.vmem [shape: f32[64,1], index: 5, kind: input, shape index: {}]
  %s6 = inlined_call_operand.<no memory space> [shape: f32[1,1], index: 6, kind: input, shape index: {}]
  %s7 = inlined_call_operand.hbm [shape: f32[1,1024], index: 7, kind: output, shape index: {}]
  %s8 = sld [smem:[#allocation0]]
  $region61: #{tpu_custom_call.1} parent=0
    _
  %s10 = ssub.s32 1, %s8
  %s11 = scalar_select 0, %s10, %s8
  %v12 = vstv %s6
  %13 = vst [vmem:[#allocation2] sm:$0x1] %v12
  $region1: #{tpu_custom_call.1} parent=0
    #allocation3 [shape = 'u8[2048]{0}', space=vmem, size = 0x800, scoped, tag = 'output window, operand 0']
    #allocation4 [shape = 's32[2]{0}', space=sflag, size = 0x8, scoped, tag = 'scoped memory for tpu_custom_call.1']
    %14 = vsyncpa [#allocation4], 0
    %s15 = scalar_lea.sflag [#allocation4], 1
    %16 = vsyncpa %s15, 0
    loop: start=0, step=1, limit=6
    $region2: #{tpu_custom_call.1} parent=1 // loop_pre_header
      _
    $region3: #{tpu_custom_call.1} parent=1 // loop_header
      %s18 = sphi 0, %s22
      %p19 = scmp.ge.s32.totalorder %s18, 6
      %s28 = sphi 0, %s30
      %s31 = sphi 0, %s28
      %s32 = sphi 0, %s31
      %s48 = sphi 0, %s32
      %s52 = sphi 0, %s52
      %s54 = sphi 0, %s52
      %s55 = sphi 0, %s54
      %s69 = sphi 0, %s55
      %s73 = sphi 0, %s73
      %s75 = sphi 0, %s73
      %s76 = sphi 0, %s75
      %s90 = sphi 0, %s76
      %s94 = sphi 0, %s94
      %s96 = sphi 0, %s94
      %s97 = sphi 0, %s96
      %s111 = sphi 0, %s97
      %s115 = sphi 0, %s115
      %s117 = sphi 0, %s115
      %s118 = sphi 0, %s117
      %s132 = sphi 0, %s118
      %s136 = sphi 0, %s136
      %s138 = sphi 0, %s136
      %s139 = sphi 0, %s138
      %s153 = sphi 0, %s139
      %s157 = sphi 0, %s157
      %s159 = sphi 0, %s157
      %s160 = sphi 0, %s159
      %s174 = sphi 0, %s160
      %s180 = sphi 0, %s182
      %s183 = sphi 0, %s180
      %s184 = sphi 0, %s183
      %s200 = sphi 0, %s184
    $region4: #{tpu_custom_call.1} parent=1 // loop_header_branch
      %21 = sbr.rel (%p19) target = $region8
    $region5: #{tpu_custom_call.1} parent=1 // loop_body
      %s23 = ssub.s32 %s18, 1
      %s24 = ssub.s32 %s18, 2
      %s25 = sadd.s32 %s18, 1
      %s26 = ssub.s32 %s18, %s25
      %p27 = scmp.eq.s32.totalorder %s26, 0
      %s29 = sadd.s32 %s28, 1
      %s30 = scalar_select %p27, %s28, %s29
      %p33 = pneg %p27
      %p34 = scmp.eq.s32.totalorder %s18, 3
      %p35 = por %p33, %p34
      %p36 = scmp.ne.s32.totalorder %s28, %s31
      %p37 = scmp.eq.s32.totalorder %s18, 0
      %p38 = por %p36, %p37
      %p39 = scmp.ne.s32.totalorder %s28, %s31
      %p40 = scmp.eq.s32.totalorder %s23, 3
      %p41 = por %p39, %p40
      %p42 = scmp.ne.s32.totalorder %s31, %s32
      %p43 = scmp.eq.s32.totalorder %s23, 0
      %p44 = por %p42, %p43
      %p45 = scmp.ne.s32.totalorder %s31, %s32
      %p46 = scmp.eq.s32.totalorder %s24, 3
      %p47 = por %p45, %p46
      %p49 = scmp.ne.s32.totalorder %s32, %s48
      %p50 = scmp.eq.s32.totalorder %s24, 0
      %p51 = por %p49, %p50
      %s53 = sadd.s32 %s52, 1
      %p56 = scmp.eq.s32.totalorder %s18, 3
      %p57 = scmp.ne.s32.totalorder %s52, %s54
      %p58 = scmp.eq.s32.totalorder %s18, 0
      %p59 = por %p57, %p58
      %p60 = scmp.ne.s32.totalorder %s52, %s54
      %p61 = scmp.eq.s32.totalorder %s23, 3
      %p62 = por %p60, %p61
      %p63 = scmp.ne.s32.totalorder %s54, %s55
      %p64 = scmp.eq.s32.totalorder %s23, 0
      %p65 = por %p63, %p64
      %p66 = scmp.ne.s32.totalorder %s54, %s55
      %p67 = scmp.eq.s32.totalorder %s24, 3
      %p68 = por %p66, %p67
      %p70 = scmp.ne.s32.totalorder %s55, %s69
      %p71 = scmp.eq.s32.totalorder %s24, 0
      %p72 = por %p70, %p71
      %s74 = sadd.s32 %s73, 1
      %p77 = scmp.eq.s32.totalorder %s18, 3
      %p78 = scmp.ne.s32.totalorder %s73, %s75
      %p79 = scmp.eq.s32.totalorder %s18, 0
      %p80 = por %p78, %p79
      %p81 = scmp.ne.s32.totalorder %s73, %s75
      %p82 = scmp.eq.s32.totalorder %s23, 3
      %p83 = por %p81, %p82
      %p84 = scmp.ne.s32.totalorder %s75, %s76
      %p85 = scmp.eq.s32.totalorder %s23, 0
      %p86 = por %p84, %p85
      %p87 = scmp.ne.s32.totalorder %s75, %s76
      %p88 = scmp.eq.s32.totalorder %s24, 3
      %p89 = por %p87, %p88
      %p91 = scmp.ne.s32.totalorder %s76, %s90
      %p92 = scmp.eq.s32.totalorder %s24, 0
      %p93 = por %p91, %p92
      %s95 = sadd.s32 %s94, 1
      %p98 = scmp.eq.s32.totalorder %s18, 3
      %p99 = scmp.ne.s32.totalorder %s94, %s96
      %p100 = scmp.eq.s32.totalorder %s18, 0
      %p101 = por %p99, %p100
      %p102 = scmp.ne.s32.totalorder %s94, %s96
      %p103 = scmp.eq.s32.totalorder %s23, 3
      %p104 = por %p102, %p103
      %p105 = scmp.ne.s32.totalorder %s96, %s97
      %p106 = scmp.eq.s32.totalorder %s23, 0
      %p107 = por %p105, %p106
      %p108 = scmp.ne.s32.totalorder %s96, %s97
      %p109 = scmp.eq.s32.totalorder %s24, 3
      %p110 = por %p108, %p109
      %p112 = scmp.ne.s32.totalorder %s97, %s111
      %p113 = scmp.eq.s32.totalorder %s24, 0
      %p114 = por %p112, %p113
      %s116 = sadd.s32 %s115, 1
      %p119 = scmp.eq.s32.totalorder %s18, 3
      %p120 = scmp.ne.s32.totalorder %s115, %s117
      %p121 = scmp.eq.s32.totalorder %s18, 0
      %p122 = por %p120, %p121
      %p123 = scmp.ne.s32.totalorder %s115, %s117
      %p124 = scmp.eq.s32.totalorder %s23, 3
      %p125 = por %p123, %p124
      %p126 = scmp.ne.s32.totalorder %s117, %s118
      %p127 = scmp.eq.s32.totalorder %s23, 0
      %p128 = por %p126, %p127
      %p129 = scmp.ne.s32.totalorder %s117, %s118
      %p130 = scmp.eq.s32.totalorder %s24, 3
      %p131 = por %p129, %p130
      %p133 = scmp.ne.s32.totalorder %s118, %s132
      %p134 = scmp.eq.s32.totalorder %s24, 0
      %p135 = por %p133, %p134
      %s137 = sadd.s32 %s136, 1
      %p140 = scmp.eq.s32.totalorder %s18, 3
      %p141 = scmp.ne.s32.totalorder %s136, %s138
      %p142 = scmp.eq.s32.totalorder %s18, 0
      %p143 = por %p141, %p142
      %p144 = scmp.ne.s32.totalorder %s136, %s138
      %p145 = scmp.eq.s32.totalorder %s23, 3
      %p146 = por %p144, %p145
      %p147 = scmp.ne.s32.totalorder %s138, %s139
      %p148 = scmp.eq.s32.totalorder %s23, 0
      %p149 = por %p147, %p148
      %p150 = scmp.ne.s32.totalorder %s138, %s139
      %p151 = scmp.eq.s32.totalorder %s24, 3
      %p152 = por %p150, %p151
      %p154 = scmp.ne.s32.totalorder %s139, %s153
      %p155 = scmp.eq.s32.totalorder %s24, 0
      %p156 = por %p154, %p155
      %s158 = sadd.s32 %s157, 1
      %p161 = scmp.eq.s32.totalorder %s18, 3
      %p162 = scmp.ne.s32.totalorder %s157, %s159
      %p163 = scmp.eq.s32.totalorder %s18, 0
      %p164 = por %p162, %p163
      %p165 = scmp.ne.s32.totalorder %s157, %s159
      %p166 = scmp.eq.s32.totalorder %s23, 3
      %p167 = por %p165, %p166
      %p168 = scmp.ne.s32.totalorder %s159, %s160
      %p169 = scmp.eq.s32.totalorder %s23, 0
      %p170 = por %p168, %p169
      %p171 = scmp.ne.s32.totalorder %s159, %s160
      %p172 = scmp.eq.s32.totalorder %s24, 3
      %p173 = por %p171, %p172
      %p175 = scmp.ne.s32.totalorder %s160, %s174
      %p176 = scmp.eq.s32.totalorder %s24, 0
      %p177 = por %p175, %p176
      %s178 = ssub.s32 %s18, %s25
      %p179 = scmp.eq.s32.totalorder %s178, 0
      %s181 = sadd.s32 %s180, 1
      %s182 = scalar_select %p179, %s180, %s181
      %p185 = pneg %p179
      %p186 = scmp.eq.s32.totalorder %s18, 3
      %p187 = por %p185, %p186
      %p188 = scmp.ne.s32.totalorder %s180, %s183
      %p189 = scmp.eq.s32.totalorder %s18, 0
      %p190 = por %p188, %p189
      %p191 = scmp.ne.s32.totalorder %s180, %s183
      %p192 = scmp.eq.s32.totalorder %s23, 3
      %p193 = por %p191, %p192
      %p194 = scmp.ne.s32.totalorder %s183, %s184
      %p195 = scmp.eq.s32.totalorder %s23, 0
      %p196 = por %p194, %p195
      %p197 = scmp.ne.s32.totalorder %s183, %s184
      %p198 = scmp.eq.s32.totalorder %s24, 3
      %p199 = por %p197, %p198
      %p201 = scmp.ne.s32.totalorder %s184, %s200
      %p202 = scmp.eq.s32.totalorder %s24, 0
      %p203 = por %p201, %p202
      %p204 = scmp.le.s32.totalorder 1, %s18
      %p205 = scmp.lt.s32.totalorder %s18, 5
      %p206 = pnand %p204, %p205
      %p207 = pneg %p206
      // Predicated region
      $region9: #{tpu_custom_call.1} parent=5 // pred_check
        _
      $region10: #{tpu_custom_call.1} parent=5 // pred_check_branch
        %209 = sbr.rel (%p206) target = $region12
      $region11: #{tpu_custom_call.1} parent=5 // pred_region
        %s210 = ssub.s32 %s18, 1
        // Predicated region
        $region13: #{tpu_custom_call.1} parent=11 // pred_check
          %p211 = pneg %p65
        $region14: #{tpu_custom_call.1} parent=11 // pred_check_branch
          %213 = sbr.rel (%p211) target = $region16
        $region15: #{tpu_custom_call.1} parent=11 // pred_region
          _
        $region16: #{tpu_custom_call.1} parent=11 // pred_fallthru
          _
        // Predicated region
        $region17: #{tpu_custom_call.1} parent=11 // pred_check
          %p214 = pneg %p86
        $region18: #{tpu_custom_call.1} parent=11 // pred_check_branch
          %216 = sbr.rel (%p214) target = $region20
        $region19: #{tpu_custom_call.1} parent=11 // pred_region
          _
        $region20: #{tpu_custom_call.1} parent=11 // pred_fallthru
          _
        // Predicated region
        $region21: #{tpu_custom_call.1} parent=11 // pred_check
          %p217 = pneg %p107
        $region22: #{tpu_custom_call.1} parent=11 // pred_check_branch
          %219 = sbr.rel (%p217) target = $region24
        $region23: #{tpu_custom_call.1} parent=11 // pred_region
          _
        $region24: #{tpu_custom_call.1} parent=11 // pred_fallthru
          _
        // Predicated region
        $region25: #{tpu_custom_call.1} parent=11 // pred_check
          %p220 = pneg %p128
        $region26: #{tpu_custom_call.1} parent=11 // pred_check_branch
          %222 = sbr.rel (%p220) target = $region28
        $region27: #{tpu_custom_call.1} parent=11 // pred_region
          _
        $region28: #{tpu_custom_call.1} parent=11 // pred_fallthru
          _
        // Predicated region
        $region29: #{tpu_custom_call.1} parent=11 // pred_check
          %p223 = pneg %p149
        $region30: #{tpu_custom_call.1} parent=11 // pred_check_branch
          %225 = sbr.rel (%p223) target = $region32
        $region31: #{tpu_custom_call.1} parent=11 // pred_region
          _
        $region32: #{tpu_custom_call.1} parent=11 // pred_fallthru
          _
        // Predicated region
        $region33: #{tpu_custom_call.1} parent=11 // pred_check
          %p226 = pneg %p170
        $region34: #{tpu_custom_call.1} parent=11 // pred_check_branch
          %228 = sbr.rel (%p226) target = $region36
        $region35: #{tpu_custom_call.1} parent=11 // pred_region
          _
        $region36: #{tpu_custom_call.1} parent=11 // pred_fallthru
          _
      $region12: #{tpu_custom_call.1} parent=5 // pred_fallthru
        _
      %p229 = scmp.lt.s32.totalorder %s18, 4
      // Predicated region
      $region37: #{tpu_custom_call.1} parent=5 // pred_check
        %p230 = pneg %p229
      $region38: #{tpu_custom_call.1} parent=5 // pred_check_branch
        %232 = sbr.rel (%p230) target = $region40
      $region39: #{tpu_custom_call.1} parent=5 // pred_region
        // Predicated region
        $region41: #{tpu_custom_call.1} parent=39 // pred_check
          %p233 = pneg %p38
        $region42: #{tpu_custom_call.1} parent=39 // pred_check_branch
          %235 = sbr.rel (%p233) target = $region44
        $region43: #{tpu_custom_call.1} parent=39 // pred_region
          %s236 = smul.u32 2, %s18
          %p237 = scmp.lt.s32.totalorder %s236, 7
          %s238 = scalar_select %p237, %s236, 7
          %s239 = smul.addr %s238, 2
          %s240 = scalar_lea.vmem %s0, %s239
          %s241 = smul.u32 2, %s18
        $region44: #{tpu_custom_call.1} parent=39 // pred_fallthru
          _
      $region40: #{tpu_custom_call.1} parent=5 // pred_fallthru
        _
      %p242 = scmp.le.s32.totalorder 1, %s18
      %p243 = scmp.lt.s32.totalorder %s18, 5
      %p244 = pnand %p242, %p243
      %p245 = pneg %p244
      // Predicated region
      $region45: #{tpu_custom_call.1} parent=5 // pred_check
        _
      $region46: #{tpu_custom_call.1} parent=5 // pred_check_branch
        %247 = sbr.rel (%p244) target = $region48
      $region47: #{tpu_custom_call.1} parent=5 // pred_region
        %s248 = ssub.s32 %s18, 1
        %s249 = smul.u32 2, %s23
        %p250 = scmp.lt.s32.totalorder %s249, 7
        %s251 = scalar_select %p250, %s249, 7
        %s252 = smul.addr %s251, 2
        %s253 = scalar_lea.vmem %s0, %s252
        %p254 = pneg %p44
        %p255 = pneg %p41
        %p256 = pneg %p65
        %p257 = pneg %p62
        %p258 = pneg %p86
        %p259 = pneg %p83
        %p260 = pneg %p107
        %p261 = pneg %p104
        %p262 = pneg %p128
        %p263 = pneg %p125
        %p264 = pneg %p149
        %p265 = pneg %p146
        %p266 = pneg %p170
        %p267 = pneg %p167
        %p268 = pneg %p196
        %p269 = pneg %p193
        %s270 = sand.u32 %s183, 1
        %s271 = scalar_lea.sflag [#allocation4], %s270
        %s272 = sand.u32 %s183, 1
        %s273 = smul.addr %s272, 2
        %s274 = scalar_lea.vmem [#allocation3], %s273
        %s275 = smul.u32 2, %s23
        %p276 = scmp.lt.s32.totalorder %s275, 7
        %s277 = scalar_select %p276, %s275, 7
        %s278 = smul.addr %s277, 2
        %s279 = scalar_lea.vmem %s0, %s278
        %s280 = smul.u32 2, %s23
        %s281 = smul.u32 2, %s23
        %v283 = vld [vmem:[%s1] sm:$0xff]
        %v284 = vld [vmem:[%s1 + $0x8] sm:$0xff]
        %v285 = vld [vmem:[%s1 + $0x10] sm:$0xff]
        %v286 = vld [vmem:[%s1 + $0x18] sm:$0xff]
        %v287 = vpack.c.bf16 %v284, %v283
        %v288 = vpack.c.bf16 %v286, %v285
        %v289 = vld [vmem:[%s2] sm:$0xff]
        %v290 = vld [vmem:[%s2 + $0x8] sm:$0xff]
        %v291 = vld [vmem:[%s2 + $0x10] sm:$0xff]
        %v292 = vld [vmem:[%s2 + $0x18] sm:$0xff]
        %v293 = vld [vmem:[%s2 + $0x20] sm:$0xff]
        %v294 = vld [vmem:[%s2 + $0x28] sm:$0xff]
        %v295 = vld [vmem:[%s2 + $0x30] sm:$0xff]
        %v296 = vld [vmem:[%s2 + $0x38] sm:$0xff]
        %v297 = vpack.c.bf16 %v290, %v289
        %v298 = vpack.c.bf16 %v292, %v291
        %v299 = vpack.c.bf16 %v294, %v293
        %v300 = vpack.c.bf16 %v296, %v295
        %vm301 = vcmask 261120
        %v303 = vsel %vm301, %v297, 0
        %v306 = vsel %vm301, %v298, 0
        %v309 = vsel %vm301, %v299, 0
        %v312 = vsel %vm301, %v300, 0
        %314 = vmatprep.subr.bf16.mxu0 0
        %315 = vmatpush1.bf16.msra.mxu0 0
        %316 = vmatprep.subr.bf16.mxu0 0
        %317 = vmatpush1.bf16.msra.mxu0 0
        %318 = vmatprep.subr.bf16.mxu0 0
        %319 = vmatpush1.bf16.msra.mxu0 0
        %320 = vmatprep.subr.bf16.mxu0 0
        %321 = vmatpush1.bf16.msra.mxu0 0
        %322 = vmatprep.subr.bf16.mxu0 0
        %323 = vmatpush1.bf16.msra.mxu0 0
        %324 = vmatprep.subr.bf16.mxu0 0
        %325 = vmatpush1.bf16.msra.mxu0 0
        %326 = vmatprep.subr.bf16.mxu0 0
        %327 = vmatpush1.bf16.msra.mxu0 %v288
        %328 = vmatprep.subr.bf16.mxu0 0
        %329 = vmatpush1.bf16.msra.mxu0 %v287
        %330 = vmatprep.subr.bf16.mxu0 0
        %331 = vmatpush2.bf16.msra.mxu0 0
        %332 = vmatprep.subr.bf16.mxu0 0
        %333 = vmatpush2.bf16.msra.mxu0 0
        %334 = vmatprep.subr.bf16.mxu0 0
        %335 = vmatpush2.bf16.msra.mxu0 0
        %336 = vmatprep.subr.bf16.mxu0 0
        %337 = vmatpush2.bf16.msra.mxu0 0
        %338 = vmatprep.subr.bf16.mxu0 0
        %339 = vmatpush2.bf16.msra.mxu0 0
        %340 = vmatprep.subr.bf16.mxu0 0
        %341 = vmatpush2.bf16.msra.mxu0 0
        %342 = vmatprep.subr.bf16.mxu0 0
        %343 = vmatpush2.bf16.msra.mxu0 0
        %344 = vmatprep.subr.bf16.mxu0 0
        %345 = vmatpush2.bf16.msra.mxu0 0
        %346 = vmatprep.mubr.bf16.mxu0 0
        %347 = vmatmul.mubr.bf16.gmra.mxu0 %v303
        %v348 = vpop.f32.mrf.mxu0
        %v349 = vadd.f32 0.0, %v348
        %v350 = vpop.f32.mrf.mxu0
        %v351 = vpop.f32.mrf.mxu0
        %v352 = vadd.f32 0.0, %v351
        %v353 = vpop.f32.mrf.mxu0
        %354 = vmatprep.mubr.bf16.mxu0 0
        %355 = vmatmul.mubr.bf16.gmra.mxu0 %v306
        %v356 = vpop.f32.mrf.mxu0
        %v357 = vadd.f32 0.0, %v356
        %v358 = vpop.f32.mrf.mxu0
        %v359 = vpop.f32.mrf.mxu0
        %v360 = vadd.f32 0.0, %v359
        %v361 = vpop.f32.mrf.mxu0
        %362 = vmatprep.mubr.bf16.mxu0 0
        %363 = vmatmul.mubr.bf16.gmra.mxu0 %v309
        %v364 = vpop.f32.mrf.mxu0
        %v365 = vadd.f32 0.0, %v364
        %v366 = vpop.f32.mrf.mxu0
        %v367 = vpop.f32.mrf.mxu0
        %v368 = vadd.f32 0.0, %v367
        %v369 = vpop.f32.mrf.mxu0
        %370 = vmatprep.mubr.bf16.mxu0 0
        %371 = vmatmul.mubr.bf16.gmra.mxu0 %v312
        %v372 = vpop.f32.mrf.mxu0
        %v373 = vadd.f32 0.0, %v372
        %v374 = vpop.f32.mrf.mxu0
        %v375 = vpop.f32.mrf.mxu0
        %v376 = vadd.f32 0.0, %v375
        %v377 = vpop.f32.mrf.mxu0
        %378 = vdwg.mxu0
        %v379 = vld [vmem:[%s3] sm:$0xff]
        %v380 = vld [vmem:[%s3 + $0x8] sm:$0xff]
        %v381 = vld [vmem:[%s3 + $0x10] sm:$0xff]
        %v382 = vld [vmem:[%s3 + $0x18] sm:$0xff]
        %v383 = vld [vmem:[%s3 + $0x20] sm:$0xff]
        %v384 = vld [vmem:[%s3 + $0x28] sm:$0xff]
        %v385 = vld [vmem:[%s3 + $0x30] sm:$0xff]
        %v386 = vld [vmem:[%s3 + $0x38] sm:$0xff]
        %v387 = vpack.c.bf16 %v380, %v379
        %v388 = vpack.c.bf16 %v382, %v381
        %v389 = vpack.c.bf16 %v384, %v383
        %v390 = vpack.c.bf16 %v386, %v385
        %v392 = vsel %vm301, %v387, 0
        %v395 = vsel %vm301, %v388, 0
        %v398 = vsel %vm301, %v389, 0
        %v401 = vsel %vm301, %v390, 0
        %403 = vmatprep.subr.bf16.mxu0 0
        %404 = vmatpush1.bf16.msra.mxu0 0
        %405 = vmatprep.subr.bf16.mxu0 0
        %406 = vmatpush1.bf16.msra.mxu0 0
        %407 = vmatprep.subr.bf16.mxu0 0
        %408 = vmatpush1.bf16.msra.mxu0 0
        %409 = vmatprep.subr.bf16.mxu0 0
        %410 = vmatpush1.bf16.msra.mxu0 0
        %411 = vmatprep.subr.bf16.mxu0 0
        %412 = vmatpush1.bf16.msra.mxu0 0
        %413 = vmatprep.subr.bf16.mxu0 0
        %414 = vmatpush1.bf16.msra.mxu0 0
        %415 = vmatprep.subr.bf16.mxu0 0
        %416 = vmatpush1.bf16.msra.mxu0 %v288
        %417 = vmatprep.subr.bf16.mxu0 0
        %418 = vmatpush1.bf16.msra.mxu0 %v287
        %419 = vmatprep.subr.bf16.mxu0 0
        %420 = vmatpush2.bf16.msra.mxu0 0
        %421 = vmatprep.subr.bf16.mxu0 0
        %422 = vmatpush2.bf16.msra.mxu0 0
        %423 = vmatprep.subr.bf16.mxu0 0
        %424 = vmatpush2.bf16.msra.mxu0 0
        %425 = vmatprep.subr.bf16.mxu0 0
        %426 = vmatpush2.bf16.msra.mxu0 0
        %427 = vmatprep.subr.bf16.mxu0 0
        %428 = vmatpush2.bf16.msra.mxu0 0
        %429 = vmatprep.subr.bf16.mxu0 0
        %430 = vmatpush2.bf16.msra.mxu0 0
        %431 = vmatprep.subr.bf16.mxu0 0
        %432 = vmatpush2.bf16.msra.mxu0 0
        %433 = vmatprep.subr.bf16.mxu0 0
        %434 = vmatpush2.bf16.msra.mxu0 0
        %435 = vmatprep.mubr.bf16.mxu0 0
        %436 = vmatmul.mubr.bf16.gmra.mxu0 %v392
        %v437 = vpop.f32.mrf.mxu0
        %v438 = vadd.f32 0.0, %v437
        %v439 = vpop.f32.mrf.mxu0
        %v440 = vpop.f32.mrf.mxu0
        %v441 = vadd.f32 0.0, %v440
        %v442 = vpop.f32.mrf.mxu0
        %443 = vmatprep.mubr.bf16.mxu0 0
        %444 = vmatmul.mubr.bf16.gmra.mxu0 %v395
        %v445 = vpop.f32.mrf.mxu0
        %v446 = vadd.f32 0.0, %v445
        %v447 = vpop.f32.mrf.mxu0
        %v448 = vpop.f32.mrf.mxu0
        %v449 = vadd.f32 0.0, %v448
        %v450 = vpop.f32.mrf.mxu0
        %451 = vmatprep.mubr.bf16.mxu0 0
        %452 = vmatmul.mubr.bf16.gmra.mxu0 %v398
        %v453 = vpop.f32.mrf.mxu0
        %v454 = vadd.f32 0.0, %v453
        %v455 = vpop.f32.mrf.mxu0
        %v456 = vpop.f32.mrf.mxu0
        %v457 = vadd.f32 0.0, %v456
        %v458 = vpop.f32.mrf.mxu0
        %459 = vmatprep.mubr.bf16.mxu0 0
        %460 = vmatmul.mubr.bf16.gmra.mxu0 %v401
        %v461 = vpop.f32.mrf.mxu0
        %v462 = vadd.f32 0.0, %v461
        %v463 = vpop.f32.mrf.mxu0
        %v464 = vpop.f32.mrf.mxu0
        %v465 = vadd.f32 0.0, %v464
        %v466 = vpop.f32.mrf.mxu0
        %467 = vdwg.mxu0
        %476 = vrot.lane.b32.xlu0 %v438, 64
        %v477 = vpop.permute.xlu0 %476
        %478 = vrot.lane.b32.xlu0 %v441, 64
        %v479 = vpop.permute.xlu0 %478
        %480 = vrot.lane.b32.xlu0 %v446, 64
        %v481 = vpop.permute.xlu0 %480
        %482 = vrot.lane.b32.xlu0 %v449, 64
        %v483 = vpop.permute.xlu0 %482
        %484 = vrot.lane.b32.xlu0 %v454, 64
        %v485 = vpop.permute.xlu0 %484
        %486 = vrot.lane.b32.xlu0 %v457, 64
        %v487 = vpop.permute.xlu0 %486
        %488 = vrot.lane.b32.xlu0 %v462, 64
        %v489 = vpop.permute.xlu0 %488
        %490 = vrot.lane.b32.xlu0 %v465, 64
        %v491 = vpop.permute.xlu0 %490
        %vm500 = vcmask 523264
        %v501 = vsel %vm500, %v349, %v477
        %v502 = vsel %vm500, %v352, %v479
        %v503 = vsel %vm500, %v357, %v481
        %v504 = vsel %vm500, %v360, %v483
        %v505 = vsel %vm500, %v365, %v485
        %v506 = vsel %vm500, %v368, %v487
        %v507 = vsel %vm500, %v373, %v489
        %v508 = vsel %vm500, %v376, %v491
        %v509 = vpack.c.bf16 %v502, %v501
        %v510 = vpack.c.bf16 %v504, %v503
        %v511 = vpack.c.bf16 %v506, %v505
        %v512 = vpack.c.bf16 %v508, %v507
        %v513 = vld [vmem:[%s279] sm:$0xf]
        %v514 = vadd.s32 %v513, 64
        %v515 = vlaneseq
        %v516 = vshrl.u32 %v515, 7
        %v517 = vadd.s32 %v516, 8
        %v518 = vadd.s32 %v516, 16
        %v519 = vadd.s32 %v516, 24
        %v520 = vadd.s32 %v516, 32
        %v521 = vadd.s32 %v516, 40
        %v522 = vadd.s32 %v516, 48
        %v523 = vadd.s32 %v516, 56
        %v524 = vadd.s32 %v516, 64
        %v525 = vadd.s32 %v516, 72
        %v526 = vadd.s32 %v516, 80
        %v527 = vadd.s32 %v516, 88
        %v528 = vadd.s32 %v516, 96
        %v529 = vadd.s32 %v516, 104
        %v530 = vadd.s32 %v516, 112
        %v531 = vadd.s32 %v516, 120
        %v532 = vlaneseq
        %v533 = vshrl.u32 %v532, 7
        %v534 = vsub.s32 0, %v533
        %v535 = vrot.slane %v513, %v534
        %v536 = vlaneseq
        %v537 = vshrl.u32 %v536, 7
        %v538 = vsub.s32 2, %v537
        %v539 = vrot.slane %v513, %v538
        %v540 = vlaneseq
        %v541 = vshrl.u32 %v540, 7
        %v542 = vsub.s32 0, %v541
        %v543 = vrot.slane %v535, %v542
        %v544 = vlaneseq
        %v545 = vshrl.u32 %v544, 7
        %v546 = vsub.s32 0, %v545
        %v547 = vrot.slane %v539, %v546
        %vm548 = vcmp.eq.s32.totalorder %v516, %v543
        %vm549 = vcmp.eq.s32.totalorder %v516, %v547
        %vm550 = vcmp.eq.s32.totalorder %v517, %v543
        %vm551 = vcmp.eq.s32.totalorder %v517, %v547
        %vm552 = vcmp.eq.s32.totalorder %v518, %v543
        %vm553 = vcmp.eq.s32.totalorder %v518, %v547
        %vm554 = vcmp.eq.s32.totalorder %v519, %v543
        %vm555 = vcmp.eq.s32.totalorder %v519, %v547
        %vm556 = vcmp.eq.s32.totalorder %v520, %v543
        %vm557 = vcmp.eq.s32.totalorder %v520, %v547
        %vm558 = vcmp.eq.s32.totalorder %v521, %v543
        %vm559 = vcmp.eq.s32.totalorder %v521, %v547
        %vm560 = vcmp.eq.s32.totalorder %v522, %v543
        %vm561 = vcmp.eq.s32.totalorder %v522, %v547
        %vm562 = vcmp.eq.s32.totalorder %v523, %v543
        %vm563 = vcmp.eq.s32.totalorder %v523, %v547
        %vm564 = vcmp.eq.s32.totalorder %v524, %v543
        %vm565 = vcmp.eq.s32.totalorder %v524, %v547
        %vm566 = vcmp.eq.s32.totalorder %v525, %v543
        %vm567 = vcmp.eq.s32.totalorder %v525, %v547
        %vm568 = vcmp.eq.s32.totalorder %v526, %v543
        %vm569 = vcmp.eq.s32.totalorder %v526, %v547
        %vm570 = vcmp.eq.s32.totalorder %v527, %v543
        %vm571 = vcmp.eq.s32.totalorder %v527, %v547
        %vm572 = vcmp.eq.s32.totalorder %v528, %v543
        %vm573 = vcmp.eq.s32.totalorder %v528, %v547
        %vm574 = vcmp.eq.s32.totalorder %v529, %v543
        %vm575 = vcmp.eq.s32.totalorder %v529, %v547
        %vm576 = vcmp.eq.s32.totalorder %v530, %v543
        %vm577 = vcmp.eq.s32.totalorder %v530, %v547
        %vm578 = vcmp.eq.s32.totalorder %v531, %v543
        %vm579 = vcmp.eq.s32.totalorder %v531, %v547
        %v580 = vlaneseq
        %v581 = vshrl.u32 %v580, 7
        %v582 = vsub.s32 1, %v581
        %v583 = vrot.slane %v514, %v582
        %v584 = vlaneseq
        %v585 = vshrl.u32 %v584, 7
        %v586 = vsub.s32 3, %v585
        %v587 = vrot.slane %v514, %v586
        %v588 = vlaneseq
        %v589 = vshrl.u32 %v588, 7
        %v590 = vsub.s32 1, %v589
        %v591 = vrot.slane %v583, %v590
        %v592 = vlaneseq
        %v593 = vshrl.u32 %v592, 7
        %v594 = vsub.s32 1, %v593
        %v595 = vrot.slane %v587, %v594
        %vm596 = vcmp.eq.s32.totalorder %v516, %v591
        %vm597 = vcmp.eq.s32.totalorder %v516, %v595
        %vm598 = vcmp.eq.s32.totalorder %v517, %v591
        %vm599 = vcmp.eq.s32.totalorder %v517, %v595
        %vm600 = vcmp.eq.s32.totalorder %v518, %v591
        %vm601 = vcmp.eq.s32.totalorder %v518, %v595
        %vm602 = vcmp.eq.s32.totalorder %v519, %v591
        %vm603 = vcmp.eq.s32.totalorder %v519, %v595
        %vm604 = vcmp.eq.s32.totalorder %v520, %v591
        %vm605 = vcmp.eq.s32.totalorder %v520, %v595
        %vm606 = vcmp.eq.s32.totalorder %v521, %v591
        %vm607 = vcmp.eq.s32.totalorder %v521, %v595
        %vm608 = vcmp.eq.s32.totalorder %v522, %v591
        %vm609 = vcmp.eq.s32.totalorder %v522, %v595
        %vm610 = vcmp.eq.s32.totalorder %v523, %v591
        %vm611 = vcmp.eq.s32.totalorder %v523, %v595
        %vm612 = vcmp.eq.s32.totalorder %v524, %v591
        %vm613 = vcmp.eq.s32.totalorder %v524, %v595
        %vm614 = vcmp.eq.s32.totalorder %v525, %v591
        %vm615 = vcmp.eq.s32.totalorder %v525, %v595
        %vm616 = vcmp.eq.s32.totalorder %v526, %v591
        %vm617 = vcmp.eq.s32.totalorder %v526, %v595
        %vm618 = vcmp.eq.s32.totalorder %v527, %v591
        %vm619 = vcmp.eq.s32.totalorder %v527, %v595
        %vm620 = vcmp.eq.s32.totalorder %v528, %v591
        %vm621 = vcmp.eq.s32.totalorder %v528, %v595
        %vm622 = vcmp.eq.s32.totalorder %v529, %v591
        %vm623 = vcmp.eq.s32.totalorder %v529, %v595
        %vm624 = vcmp.eq.s32.totalorder %v530, %v591
        %vm625 = vcmp.eq.s32.totalorder %v530, %v595
        %vm626 = vcmp.eq.s32.totalorder %v531, %v591
        %vm627 = vcmp.eq.s32.totalorder %v531, %v595
        %vm628 = vmor %vm548, %vm596
        %vm629 = vmor %vm549, %vm597
        %vm630 = vmor %vm550, %vm598
        %vm631 = vmor %vm551, %vm599
        %vm632 = vmor %vm552, %vm600
        %vm633 = vmor %vm553, %vm601
        %vm634 = vmor %vm554, %vm602
        %vm635 = vmor %vm555, %vm603
        %vm636 = vmor %vm556, %vm604
        %vm637 = vmor %vm557, %vm605
        %vm638 = vmor %vm558, %vm606
        %vm639 = vmor %vm559, %vm607
        %vm640 = vmor %vm560, %vm608
        %vm641 = vmor %vm561, %vm609
        %vm642 = vmor %vm562, %vm610
        %vm643 = vmor %vm563, %vm611
        %vm644 = vmor %vm564, %vm612
        %vm645 = vmor %vm565, %vm613
        %vm646 = vmor %vm566, %vm614
        %vm647 = vmor %vm567, %vm615
        %vm648 = vmor %vm568, %vm616
        %vm649 = vmor %vm569, %vm617
        %vm650 = vmor %vm570, %vm618
        %vm651 = vmor %vm571, %vm619
        %vm652 = vmor %vm572, %vm620
        %vm653 = vmor %vm573, %vm621
        %vm654 = vmor %vm574, %vm622
        %vm655 = vmor %vm575, %vm623
        %vm656 = vmor %vm576, %vm624
        %vm657 = vmor %vm577, %vm625
        %vm658 = vmor %vm578, %vm626
        %vm659 = vmor %vm579, %vm627
        %v660 = vsel %vm628, 1.0, 0.0
        %v661 = vsel %vm629, 1.0, 0.0
        %v662 = vsel %vm630, 1.0, 0.0
        %v663 = vsel %vm631, 1.0, 0.0
        %v664 = vsel %vm632, 1.0, 0.0
        %v665 = vsel %vm633, 1.0, 0.0
        %v666 = vsel %vm634, 1.0, 0.0
        %v667 = vsel %vm635, 1.0, 0.0
        %v668 = vsel %vm636, 1.0, 0.0
        %v669 = vsel %vm637, 1.0, 0.0
        %v670 = vsel %vm638, 1.0, 0.0
        %v671 = vsel %vm639, 1.0, 0.0
        %v672 = vsel %vm640, 1.0, 0.0
        %v673 = vsel %vm641, 1.0, 0.0
        %v674 = vsel %vm642, 1.0, 0.0
        %v675 = vsel %vm643, 1.0, 0.0
        %v676 = vsel %vm644, 1.0, 0.0
        %v677 = vsel %vm645, 1.0, 0.0
        %v678 = vsel %vm646, 1.0, 0.0
        %v679 = vsel %vm647, 1.0, 0.0
        %v680 = vsel %vm648, 1.0, 0.0
        %v681 = vsel %vm649, 1.0, 0.0
        %v682 = vsel %vm650, 1.0, 0.0
        %v683 = vsel %vm651, 1.0, 0.0
        %v684 = vsel %vm652, 1.0, 0.0
        %v685 = vsel %vm653, 1.0, 0.0
        %v686 = vsel %vm654, 1.0, 0.0
        %v687 = vsel %vm655, 1.0, 0.0
        %v688 = vsel %vm656, 1.0, 0.0
        %v689 = vsel %vm657, 1.0, 0.0
        %v690 = vsel %vm658, 1.0, 0.0
        %v691 = vsel %vm659, 1.0, 0.0
        %v692 = vpack.c.bf16 %v662, %v660
        %v693 = vpack.c.bf16 %v663, %v661
        %v694 = vpack.c.bf16 %v666, %v664
        %v695 = vpack.c.bf16 %v667, %v665
        %v696 = vpack.c.bf16 %v670, %v668
        %v697 = vpack.c.bf16 %v671, %v669
        %v698 = vpack.c.bf16 %v674, %v672
        %v699 = vpack.c.bf16 %v675, %v673
        %v700 = vpack.c.bf16 %v678, %v676
        %v701 = vpack.c.bf16 %v679, %v677
        %v702 = vpack.c.bf16 %v682, %v680
        %v703 = vpack.c.bf16 %v683, %v681
        %v704 = vpack.c.bf16 %v686, %v684
        %v705 = vpack.c.bf16 %v687, %v685
        %v706 = vpack.c.bf16 %v690, %v688
        %v707 = vpack.c.bf16 %v691, %v689
        %v708 = vld [vmem:[%s4] sm:$0xff]
        %v709 = vld [vmem:[%s4 + $0x8] sm:$0xff]
        %v710 = vld [vmem:[%s4 + $0x10] sm:$0xff]
        %v711 = vld [vmem:[%s4 + $0x18] sm:$0xff]
        %v712 = vld [vmem:[%s4 + $0x20] sm:$0xff]
        %v713 = vld [vmem:[%s4 + $0x28] sm:$0xff]
        %v714 = vld [vmem:[%s4 + $0x30] sm:$0xff]
        %v715 = vld [vmem:[%s4 + $0x38] sm:$0xff]
        %717 = vset.pattern.permute.xlu0 0
        %718 = vperm.xlu0 %717, %v708
        %v719 = vpop.permute.xlu0 %718
        %722 = vset.pattern.permute.xlu0 0
        %723 = vperm.xlu0 %722, %v709
        %v724 = vpop.permute.xlu0 %723
        %727 = vset.pattern.permute.xlu0 0
        %728 = vperm.xlu0 %727, %v710
        %v729 = vpop.permute.xlu0 %728
        %732 = vset.pattern.permute.xlu0 0
        %733 = vperm.xlu0 %732, %v711
        %v734 = vpop.permute.xlu0 %733
        %737 = vset.pattern.permute.xlu0 0
        %738 = vperm.xlu0 %737, %v712
        %v739 = vpop.permute.xlu0 %738
        %742 = vset.pattern.permute.xlu0 0
        %743 = vperm.xlu0 %742, %v713
        %v744 = vpop.permute.xlu0 %743
        %747 = vset.pattern.permute.xlu0 0
        %748 = vperm.xlu0 %747, %v714
        %v749 = vpop.permute.xlu0 %748
        %752 = vset.pattern.permute.xlu0 0
        %753 = vperm.xlu0 %752, %v715
        %v754 = vpop.permute.xlu0 %753
        %756 = vmatprep.subr.bf16.mxu0 %v707
        %757 = vmatpush1.bf16.msra.mxu0 %v706
        %758 = vmatprep.subr.bf16.mxu0 %v705
        %759 = vmatpush1.bf16.msra.mxu0 %v704
        %760 = vmatprep.subr.bf16.mxu0 %v703
        %761 = vmatpush1.bf16.msra.mxu0 %v702
        %762 = vmatprep.subr.bf16.mxu0 %v701
        %763 = vmatpush1.bf16.msra.mxu0 %v700
        %764 = vmatprep.subr.bf16.mxu0 %v699
        %765 = vmatpush1.bf16.msra.mxu0 %v698
        %766 = vmatprep.subr.bf16.mxu0 %v697
        %767 = vmatpush1.bf16.msra.mxu0 %v696
        %768 = vmatprep.subr.bf16.mxu0 %v695
        %769 = vmatpush1.bf16.msra.mxu0 %v694
        %770 = vmatprep.subr.bf16.mxu0 %v693
        %771 = vmatpush1.bf16.msra.mxu0 %v692
        %772 = vmatprep.subr.bf16.mxu0 0
        %773 = vmatpush2.bf16.msra.mxu0 0
        %774 = vmatprep.subr.bf16.mxu0 0
        %775 = vmatpush2.bf16.msra.mxu0 0
        %776 = vmatprep.subr.bf16.mxu0 0
        %777 = vmatpush2.bf16.msra.mxu0 0
        %778 = vmatprep.subr.bf16.mxu0 0
        %779 = vmatpush2.bf16.msra.mxu0 0
        %780 = vmatprep.subr.bf16.mxu0 0
        %781 = vmatpush2.bf16.msra.mxu0 0
        %782 = vmatprep.subr.bf16.mxu0 0
        %783 = vmatpush2.bf16.msra.mxu0 0
        %784 = vmatprep.subr.bf16.mxu0 0
        %785 = vmatpush2.bf16.msra.mxu0 0
        %786 = vmatprep.subr.bf16.mxu0 0
        %787 = vmatpush2.bf16.msra.mxu0 0
        %788 = vmatprep.mubr.bf16.mxu0 0
        %789 = vmatmul.mubr.bf16.gmra.mxu0 %v509
        %v790 = vpop.f32.mrf.mxu0
        %v791 = vadd.f32 %v719, %v790
        %v792 = vpop.f32.mrf.mxu0
        %v793 = vadd.f32 %v719, %v792
        %v794 = vpop.f32.mrf.mxu0
        %v795 = vadd.f32 %v724, %v794
        %v796 = vpop.f32.mrf.mxu0
        %v797 = vadd.f32 %v724, %v796
        %798 = vmatprep.mubr.bf16.mxu0 0
        %799 = vmatmul.mubr.bf16.gmra.mxu0 %v510
        %v800 = vpop.f32.mrf.mxu0
        %v801 = vadd.f32 %v729, %v800
        %v802 = vpop.f32.mrf.mxu0
        %v803 = vadd.f32 %v729, %v802
        %v804 = vpop.f32.mrf.mxu0
        %v805 = vadd.f32 %v734, %v804
        %v806 = vpop.f32.mrf.mxu0
        %v807 = vadd.f32 %v734, %v806
        %808 = vmatprep.mubr.bf16.mxu0 0
        %809 = vmatmul.mubr.bf16.gmra.mxu0 %v511
        %v810 = vpop.f32.mrf.mxu0
        %v811 = vadd.f32 %v739, %v810
        %v812 = vpop.f32.mrf.mxu0
        %v813 = vadd.f32 %v739, %v812
        %v814 = vpop.f32.mrf.mxu0
        %v815 = vadd.f32 %v744, %v814
        %v816 = vpop.f32.mrf.mxu0
        %v817 = vadd.f32 %v744, %v816
        %818 = vmatprep.mubr.bf16.mxu0 0
        %819 = vmatmul.mubr.bf16.gmra.mxu0 %v512
        %v820 = vpop.f32.mrf.mxu0
        %v821 = vadd.f32 %v749, %v820
        %v822 = vpop.f32.mrf.mxu0
        %v823 = vadd.f32 %v749, %v822
        %v824 = vpop.f32.mrf.mxu0
        %v825 = vadd.f32 %v754, %v824
        %v826 = vpop.f32.mrf.mxu0
        %v827 = vadd.f32 %v754, %v826
        %828 = vdwg.mxu0
        %v829 = vmax.f32 %v791, 0.0
        %v830 = vmax.f32 %v793, 0.0
        %v831 = vmax.f32 %v795, 0.0
        %v832 = vmax.f32 %v797, 0.0
        %v833 = vmax.f32 %v801, 0.0
        %v834 = vmax.f32 %v803, 0.0
        %v835 = vmax.f32 %v805, 0.0
        %v836 = vmax.f32 %v807, 0.0
        %v837 = vmax.f32 %v811, 0.0
        %v838 = vmax.f32 %v813, 0.0
        %v839 = vmax.f32 %v815, 0.0
        %v840 = vmax.f32 %v817, 0.0
        %v841 = vmax.f32 %v821, 0.0
        %v842 = vmax.f32 %v823, 0.0
        %v843 = vmax.f32 %v825, 0.0
        %v844 = vmax.f32 %v827, 0.0
        %v845 = vld [vmem:[%s5] sm:$0xff]
        %v846 = vld [vmem:[%s5 + $0x8] sm:$0xff]
        %v847 = vld [vmem:[%s5 + $0x10] sm:$0xff]
        %v848 = vld [vmem:[%s5 + $0x18] sm:$0xff]
        %v849 = vld [vmem:[%s5 + $0x20] sm:$0xff]
        %v850 = vld [vmem:[%s5 + $0x28] sm:$0xff]
        %v851 = vld [vmem:[%s5 + $0x30] sm:$0xff]
        %v852 = vld [vmem:[%s5 + $0x38] sm:$0xff]
        %854 = vset.pattern.permute.xlu0 0
        %855 = vperm.xlu0 %854, %v845
        %v856 = vpop.permute.xlu0 %855
        %859 = vset.pattern.permute.xlu0 0
        %860 = vperm.xlu0 %859, %v846
        %v861 = vpop.permute.xlu0 %860
        %864 = vset.pattern.permute.xlu0 0
        %865 = vperm.xlu0 %864, %v847
        %v866 = vpop.permute.xlu0 %865
        %869 = vset.pattern.permute.xlu0 0
        %870 = vperm.xlu0 %869, %v848
        %v871 = vpop.permute.xlu0 %870
        %874 = vset.pattern.permute.xlu0 0
        %875 = vperm.xlu0 %874, %v849
        %v876 = vpop.permute.xlu0 %875
        %879 = vset.pattern.permute.xlu0 0
        %880 = vperm.xlu0 %879, %v850
        %v881 = vpop.permute.xlu0 %880
        %884 = vset.pattern.permute.xlu0 0
        %885 = vperm.xlu0 %884, %v851
        %v886 = vpop.permute.xlu0 %885
        %889 = vset.pattern.permute.xlu0 0
        %890 = vperm.xlu0 %889, %v852
        %v891 = vpop.permute.xlu0 %890
        %v893 = vmul.f32 %v829, %v856
        %v894 = vmul.f32 %v830, %v856
        %v895 = vmul.f32 %v831, %v861
        %v896 = vmul.f32 %v832, %v861
        %v897 = vmul.f32 %v833, %v866
        %v898 = vmul.f32 %v834, %v866
        %v899 = vmul.f32 %v835, %v871
        %v900 = vmul.f32 %v836, %v871
        %v901 = vmul.f32 %v837, %v876
        %v902 = vmul.f32 %v838, %v876
        %v903 = vmul.f32 %v839, %v881
        %v904 = vmul.f32 %v840, %v881
        %v905 = vmul.f32 %v841, %v886
        %v906 = vmul.f32 %v842, %v886
        %v907 = vmul.f32 %v843, %v891
        %v908 = vmul.f32 %v844, %v891
        %v909 = vadd.f32 %v893, %v895
        %v910 = vadd.f32 %v909, %v897
        %v911 = vadd.f32 %v910, %v899
        %v912 = vadd.f32 %v911, %v901
        %v913 = vadd.f32 %v912, %v903
        %v914 = vadd.f32 %v913, %v905
        %v915 = vadd.f32 %v914, %v907
        %v916 = vrot.slane %v915, 4
        %v917 = vadd.f32 %v915, %v916
        %v918 = vrot.slane %v917, 2
        %v919 = vadd.f32 %v917, %v918
        %v920 = vrot.slane %v919, 1
        %v921 = vadd.f32 %v919, %v920
        %v922 = vadd.f32 %v894, %v896
        %v923 = vadd.f32 %v922, %v898
        %v924 = vadd.f32 %v923, %v900
        %v925 = vadd.f32 %v924, %v902
        %v926 = vadd.f32 %v925, %v904
        %v927 = vadd.f32 %v926, %v906
        %v928 = vadd.f32 %v927, %v908
        %v929 = vrot.slane %v928, 4
        %v930 = vadd.f32 %v928, %v929
        %v931 = vrot.slane %v930, 2
        %v932 = vadd.f32 %v930, %v931
        %v933 = vrot.slane %v932, 1
        %v934 = vadd.f32 %v932, %v933
        %v935 = vld [vmem:[#allocation2] sm:$0x1]
        %937 = vset.pattern.permute.xlu0 0
        %938 = vperm.xlu0 %937, %v935
        %v939 = vpop.permute.xlu0 %938
        %v941 = vlaneseq
        %v942 = vshrl.u32 %v941, 7
        %v943 = vsub.s32 0, %v942
        %v944 = vrot.slane %v939, %v943
        %v945 = vadd.f32 %v921, %v944
        %v946 = vadd.f32 %v934, %v944
        %v947 = vsub.f32 0.0, %v945
        %v948 = vsub.f32 0.0, %v946
        %v949 = vmul.f32 %v947, 1.442695
        %v950 = vpow.pop %v949
        %v951 = vmul.f32 %v948, 1.442695
        %v952 = vpow.pop %v951
        %v953 = vadd.f32 %v950, 1.0
        %v954 = vadd.f32 %v952, 1.0
        %v955 = vrcp.pop %v953
        %v956 = vrcp.pop %v954
        %v959 = vcombine.low %v955, %v956
        %v961 = vunpack.c.l.s4 1966171168
        %v962 = vunpack.c.0.s8 %v961
        %v963 = vlaneseq
        %v964 = vshrl.u32 %v963, 7
        %v965 = vsub.s32 %v962, %v964
        %v966 = vrot.slane %v959, %v965
        %v968 = vunpack.c.l.s4 1966171168
        %v969 = vunpack.c.0.s8 %v968
        %v970 = vlaneseq
        %v971 = vshrl.u32 %v970, 7
        %v972 = vsub.s32 %v969, %v971
        %v973 = vrot.slane %v966, %v972
        %v975 = vlaneseq
        %vm976 = vcmp.ge.s32.totalorder %v975, 0
        %vm977 = vcmp.lt.s32.totalorder %v975, 256
        %vm978 = vmand %vm976, %vm977
        %979 = vst.msk [vmem:[%s274] sm:$0x3] %vm978, %v973
        %s980 = sand.u32 %s183, 1
        %s981 = scalar_lea.sflag [#allocation4], %s980
        %s982 = sand.u32 %s183, 1
        %s983 = smul.addr %s982, 2
        %s984 = scalar_lea.vmem [#allocation3], %s983
        // Predicated region
        $region49: #{tpu_custom_call.1} parent=47 // pred_check
          %p985 = pneg %p193
        $region50: #{tpu_custom_call.1} parent=47 // pred_check_branch
          %987 = sbr.rel (%p985) target = $region52
        $region51: #{tpu_custom_call.1} parent=47 // pred_region
          %s988 = smul.u32 2, %s23
          %s990 = ssub.s32 32, 32
          %991 = vsyncadd %s981, %s990
          %s992 = smul.addr %s988, 16
          %s993 = scalar_lea.hbm %s7, %s992
          %s995 = sshll.u32 %s984, 4
          %s996 = int_to_ptr.vmem [resolvable:$true] %s995
          %998 = dma.vmem_to_hbm [thread:$0]  %s996, 32, %s993, %s981
        $region52: #{tpu_custom_call.1} parent=47 // pred_fallthru
          _
      $region48: #{tpu_custom_call.1} parent=5 // pred_fallthru
        _
      %p999 = scmp.le.s32.totalorder 2, %s18
      // Predicated region
      $region53: #{tpu_custom_call.1} parent=5 // pred_check
        %p1000 = pneg %p999
      $region54: #{tpu_custom_call.1} parent=5 // pred_check_branch
        %1002 = sbr.rel (%p1000) target = $region56
      $region55: #{tpu_custom_call.1} parent=5 // pred_region
        %s1003 = ssub.s32 %s18, 2
        // Predicated region
        $region57: #{tpu_custom_call.1} parent=55 // pred_check
          %p1004 = pneg %p199
        $region58: #{tpu_custom_call.1} parent=55 // pred_check_branch
          %1006 = sbr.rel (%p1004) target = $region60
        $region59: #{tpu_custom_call.1} parent=55 // pred_region
          %s1007 = sand.u32 %s184, 1
          %s1008 = scalar_lea.sflag [#allocation4], %s1007
          %s1009 = sand.u32 %s184, 1
          %s1010 = smul.addr %s1009, 2
          %s1011 = scalar_lea.vmem [#allocation3], %s1010
          %1012 = dma.done %s1008, 32
        $region60: #{tpu_custom_call.1} parent=55 // pred_fallthru
          _
      $region56: #{tpu_custom_call.1} parent=5 // pred_fallthru
        _
    $region6: #{tpu_custom_call.1} parent=1 // loop_footer
      %s22 = sadd.s32 1, %s18
    $region7: #{tpu_custom_call.1} parent=1 // loop_footer_branch
      %17 = sbr.rel target = $region3
    $region8: #{tpu_custom_call.1} parent=1 // loop_exit
      _
    %1013 = vsyncpa [#allocation4], 1
    %s1014 = scalar_lea.sflag [#allocation4], 1
    %1015 = vsyncpa %s1014, 1

</llo_original>
